<compile_context>
chip_gen: v7x
topology: tpu7x:2x2x1
jax: 0.10.0
libtpu: 0.0.40
codegen_flags: <defaults>
</compile_context>

<pallas_src>
import functools

import jax
import jax.numpy as jnp
from jax.experimental import pallas as pl
from jax.experimental.pallas import tpu as pltpu

_LANE = 128


def _round_up(x, m):
    return (x + m - 1) // m * m


def _pool_linear_kernel(x_ref, w_ref, b_ref, o_ref, *, fold_shifts):
    # x_ref: (TB, R, K)   w_ref: (K, Cp)   b_ref: (1, Cp)   o_ref: (TB, Cp)
    # Sublane reduce over the R packed rows (== partial max over seq positions).
    pooled = jnp.max(x_ref[...], axis=1)                      # (TB, K)
    # Fold the lane groups back onto lanes [0:H] via XLU rolls (free slot vs VPU).
    for s in fold_shifts:
        pooled = jnp.maximum(pooled, pltpu.roll(pooled, shift=s, axis=1))
    # Tiny matmul against zero-padded weight: garbage lanes hit zero weight rows.
    o_ref[...] = (
        jnp.dot(pooled, w_ref[...], preferred_element_type=jnp.float32)
        + b_ref[...]
    ).astype(o_ref.dtype)


def multiclass_classification(x, weight, bias, *, block_b=512):
    """Forward pass of MulticlassClassification.

    x:      (B, L, H)   (L must equal the MaxPool1d kernel size, 72 in the module)
    weight: (C, H)      PyTorch nn.Linear weight layout
    bias:   (C,)
    returns (B, C) float32
    """
    B, L, H = x.shape
    C = weight.shape[0]
    assert weight.shape == (C, H)

    # ---- choose input layout -------------------------------------------------
    if H % _LANE == 0:
        # Already lane-dense.
        R, K = L, H
        fold_shifts = ()
        x_packed = x
    elif _LANE % H == 0 and L % (_LANE // H) == 0:
        # Pack (L, H) -> (R, 128): each 128-lane row holds g = 128//H seq positions.
        g = _LANE // H
        R, K = (L * H) // _LANE, _LANE
        x_packed = x.reshape(B, R, K)            # row-major contiguous: free reshape
        fold_shifts = []
        s = (g // 2) * H
        while s >= H:
            fold_shifts.append(s)
            s //= 2
        fold_shifts = tuple(fold_shifts)
    else:
        # Fallback: lane-padded but still correct.
        R, K = L, H
        fold_shifts = ()
        x_packed = x

    # ---- lane-dense (padded) weight / bias / output ---------------------------
    Cp = _round_up(C, _LANE)
    w_pad = jnp.zeros((K, Cp), dtype=jnp.float32)
    w_pad = w_pad.at[:H, :C].set(weight.T.astype(jnp.float32))
    b_pad = jnp.zeros((1, Cp), dtype=jnp.float32)
    b_pad = b_pad.at[:, :C].set(bias.astype(jnp.float32).reshape(1, C))

    # ---- batch tiling ----------------------------------------------------------
    tb = _round_up(min(block_b, _round_up(B, 8)), 8)
    B_pad = _round_up(B, tb)
    if B_pad != B:
        # Padded rows produce garbage outputs that are sliced off below.
        x_packed = jnp.pad(x_packed, ((0, B_pad - B), (0, 0), (0, 0)))
    n_tiles = B_pad // tb

    itemsize = jnp.dtype(x.dtype).itemsize
    cost = pl.CostEstimate(
        flops=2 * B_pad * K * Cp,
        transcendentals=0,
        bytes_accessed=(B_pad * R * K * itemsize      # read x
                        + B_pad * Cp * 4              # write out
                        + K * Cp * 4 + Cp * 4),       # weight + bias
    )

    kernel = functools.partial(_pool_linear_kernel, fold_shifts=fold_shifts)

    # TODO(synk): for v5e with bf16 activations, upcast to f32 inside the kernel
    # before the max (v5e VPU has no bf16 ops); on v6e/v7x bf16 max is native.
    out = pl.pallas_call(
        kernel,
        out_shape=jax.ShapeDtypeStruct((B_pad, Cp), jnp.float32),
        grid=(n_tiles,),
        in_specs=[
            pl.BlockSpec((tb, R, K), lambda i: (i, 0, 0)),   # batch-tiled x
            pl.BlockSpec((K, Cp), lambda i: (0, 0)),         # weight: VMEM-resident
            pl.BlockSpec((1, Cp), lambda i: (0, 0)),         # bias:   VMEM-resident
        ],
        out_specs=pl.BlockSpec((tb, Cp), lambda i: (i, 0)),
        compiler_params=pltpu.CompilerParams(
            dimension_semantics=("parallel",),               # v7x: shard over 2 TCs
        ),
        cost_estimate=cost,
    )(x_packed, w_pad, b_pad)

    return out[:B, :C]


def _reference(x, weight, bias):
    pooled = jnp.max(jnp.transpose(x, (0, 2, 1)), axis=-1)   # (B, H)
    return pooled @ weight.T + bias


if __name__ == "__main__":
    key = jax.random.PRNGKey(0)
    k_x, k_w, k_b = jax.random.split(key, 3)

    B, L, H, C = 2, 72, 32, 8   # batch, seq (MaxPool1d kernel size), hidden, num_classes

    x = jax.random.normal(k_x, (B, L, H), dtype=jnp.float32)
    # Deterministic parameter init (synthetic; matches nn.Linear shapes).
    weight = jax.random.normal(k_w, (C, H), dtype=jnp.float32) * 0.05
    bias = jax.random.normal(k_b, (C,), dtype=jnp.float32) * 0.01

    out = multiclass_classification(x, weight, bias)
    out = jax.block_until_ready(out)

    ref = _reference(x, weight, bias)
    assert out.shape == (B, C)
    assert jnp.allclose(out, ref, atol=1e-5, rtol=1e-5), "mismatch vs reference"

    print("KERNEL_OK")
</pallas_src>

<mosaic_0001>
module attributes {stable_mosaic.version = 11 : i64} {
  func.func @_pool_linear_kernel(%arg0: i32, %arg1: memref<8x18x128xf32, #tpu.memory_space<vmem>>, %arg2: memref<128x128xf32, #tpu.memory_space<vmem>>, %arg3: memref<1x128xf32, #tpu.memory_space<vmem>>, %arg4: memref<8x128xf32, #tpu.memory_space<vmem>>) attributes {dimension_semantics = [#tpu.dimension_semantics<parallel>], iteration_bounds = array<i64: 1>, scalar_prefetch = 0 : i64, scratch_operands = 0 : i64, tpu.core_type = #tpu.core_type<tc>, window_params = [{transform_indices = @transform_0, window_bounds = array<i64: 8, 18, 128>}, {pipeline_mode = #tpu.pipeline_mode<synchronous>, transform_indices = @transform_1, window_bounds = array<i64: 128, 128>}, {pipeline_mode = #tpu.pipeline_mode<synchronous>, transform_indices = @transform_2, window_bounds = array<i64: 1, 128>}, {transform_indices = @transform_3, window_bounds = array<i64: 8, 128>}]} {
    %c0 = arith.constant 0 : index
    %c0_0 = arith.constant 0 : index
    %c0_1 = arith.constant 0 : index
    %0 = vector.load %arg1[%c0, %c0_0, %c0_1] : memref<8x18x128xf32, #tpu.memory_space<vmem>>, vector<8x18x128xf32>
    %cst = arith.constant dense<0xFF800000> : vector<8x128xf32>
    %1 = vector.multi_reduction <maximumf>, %0, %cst [1] : vector<8x18x128xf32> to vector<8x128xf32>
    %c64_i32 = arith.constant 64 : i32
    %2 = tpu.dynamic_rotate %1 by %c64_i32 dim 1 : vector<8x128xf32>, i32 -> vector<8x128xf32>
    %3 = arith.maximumf %1, %2 : vector<8x128xf32>
    %c32_i32 = arith.constant 32 : i32
    %4 = tpu.dynamic_rotate %3 by %c32_i32 dim 1 : vector<8x128xf32>, i32 -> vector<8x128xf32>
    %5 = arith.maximumf %3, %4 : vector<8x128xf32>
    %c0_2 = arith.constant 0 : index
    %c0_3 = arith.constant 0 : index
    %6 = vector.load %arg2[%c0_2, %c0_3] : memref<128x128xf32, #tpu.memory_space<vmem>>, vector<128x128xf32>
    %cst_4 = arith.constant dense<0.000000e+00> : vector<8x128xf32>
    %7 = tpu.matmul %5, %6, %cst_4 {dimension_numbers = #tpu.dot_dimension_numbers<[1], [0], [0], [1], [0, 0, 1, 1], [], []>} : vector<8x128xf32>, vector<128x128xf32>, vector<8x128xf32> -> vector<8x128xf32>
    %c0_5 = arith.constant 0 : index
    %c0_6 = arith.constant 0 : index
    %8 = vector.load %arg3[%c0_5, %c0_6] : memref<1x128xf32, #tpu.memory_space<vmem>>, vector<1x128xf32>
    %9 = vector.broadcast %8 : vector<1x128xf32> to vector<8x128xf32>
    %10 = arith.addf %7, %9 : vector<8x128xf32>
    %c0_7 = arith.constant 0 : index
    %c0_8 = arith.constant 0 : index
    %11 = vector.load %arg4[%c0_7, %c0_8] : memref<8x128xf32, #tpu.memory_space<vmem>>, vector<8x128xf32>
    tpu.vector_store %arg4[%c0_7, %c0_8], %10 {strides = array<i32>} : memref<8x128xf32, #tpu.memory_space<vmem>>, vector<8x128xf32>,
    return
  }
  func.func @transform_0(%arg0: i32) -> (i32, i32, i32) {
    %c0_i32 = arith.constant 0 : i32
    %c0_i32_0 = arith.constant 0 : i32
    %c0_i32_1 = arith.constant 0 : i32
    return %arg0, %c0_i32, %c0_i32_0 : i32, i32, i32
  }
  func.func @transform_1(%arg0: i32) -> (i32, i32) {
    %c0_i32 = arith.constant 0 : i32
    %c0_i32_0 = arith.constant 0 : i32
    %c0_i32_1 = arith.constant 0 : i32
    return %c0_i32, %c0_i32_0 : i32, i32
  }
  func.func @transform_2(%arg0: i32) -> (i32, i32) {
    %c0_i32 = arith.constant 0 : i32
    %c0_i32_0 = arith.constant 0 : i32
    %c0_i32_1 = arith.constant 0 : i32
    return %c0_i32, %c0_i32_0 : i32, i32
  }
  func.func @transform_3(%arg0: i32) -> (i32, i32) {
    %c0_i32 = arith.constant 0 : i32
    %c0_i32_0 = arith.constant 0 : i32
    return %arg0, %c0_i32 : i32, i32
  }
}

</mosaic_0001>

<llo_original>
// kernel: tpu_custom_call.1
$region0: #{tpu_custom_call.1}
  #allocation0 [shape = 'u32[]', space=smem, size = 0x4, offset = 0x4, fixed_abs, tag = 'smem constant byte address 0x4 - core index']
  #allocation1 [shape = 'u32[144,128]{1,0:T(1,128)}', space=vmem, size = 0x12000, scoped, tag = 'internal scratch']
  %s0 = inlined_call_operand.vmem [shape: f32[8,18,128], index: 0, kind: input, shape index: {}]
  %s1 = inlined_call_operand.vmem [shape: f32[128,128], index: 1, kind: input, shape index: {}]
  %s2 = inlined_call_operand.vmem [shape: f32[1,128], index: 2, kind: input, shape index: {}]
  %s3 = inlined_call_operand.hbm [shape: f32[8,128], index: 3, kind: output, shape index: {}]
  %s4 = sld [smem:[#allocation0]]
  $region22: #{tpu_custom_call.1} parent=0
    _
  %s6 = ssub.s32 1, %s4
  %s7 = scalar_select 0, %s6, %s4
  $region1: #{tpu_custom_call.1} parent=0
    #allocation2 [shape = 'u8[4096]{0}', space=vmem, size = 0x1000, scoped, tag = 'output window, operand 0, single buffered']
    #allocation3 [shape = 's32[1]{0}', space=sflag, size = 0x4, scoped, tag = 'scoped memory for tpu_custom_call.1']
    %8 = vsyncpa [#allocation3], 0
    // Predicated region
    $region2: #{tpu_custom_call.1} parent=1 // pred_check
      _
    $region3: #{tpu_custom_call.1} parent=1 // pred_check_branch
      %10 = sbr.rel (0) target = $region5
    $region4: #{tpu_custom_call.1} parent=1 // pred_region
      _
    $region5: #{tpu_custom_call.1} parent=1 // pred_fallthru
      _
    // Predicated region
    $region6: #{tpu_custom_call.1} parent=1 // pred_check
      _
    $region7: #{tpu_custom_call.1} parent=1 // pred_check_branch
      %12 = sbr.rel (0) target = $region9
    $region8: #{tpu_custom_call.1} parent=1 // pred_region
      _
    $region9: #{tpu_custom_call.1} parent=1 // pred_fallthru
      _
    // Predicated region
    $region10: #{tpu_custom_call.1} parent=1 // pred_check
      _
    $region11: #{tpu_custom_call.1} parent=1 // pred_check_branch
      %14 = sbr.rel (0) target = $region13
    $region12: #{tpu_custom_call.1} parent=1 // pred_region
      _
    $region13: #{tpu_custom_call.1} parent=1 // pred_fallthru
      _
    %v15 = vld [vmem:[%s0] sm:$0xff]
    %v16 = vld [vmem:[%s0 + $0x8] sm:$0xff]
    %v17 = vld [vmem:[%s0 + $0x10] sm:$0x3]
    %v18 = vld [vmem:[%s0 + $0x18] sm:$0xff]
    %v19 = vld [vmem:[%s0 + $0x20] sm:$0xff]
    %v20 = vld [vmem:[%s0 + $0x28] sm:$0x3]
    %v21 = vld [vmem:[%s0 + $0x30] sm:$0xff]
    %v22 = vld [vmem:[%s0 + $0x38] sm:$0xff]
    %v23 = vld [vmem:[%s0 + $0x40] sm:$0x3]
    %v24 = vld [vmem:[%s0 + $0x48] sm:$0xff]
    %v25 = vld [vmem:[%s0 + $0x50] sm:$0xff]
    %v26 = vld [vmem:[%s0 + $0x58] sm:$0x3]
    %v27 = vld [vmem:[%s0 + $0x60] sm:$0xff]
    %v28 = vld [vmem:[%s0 + $0x68] sm:$0xff]
    %v29 = vld [vmem:[%s0 + $0x70] sm:$0x3]
    %v30 = vld [vmem:[%s0 + $0x78] sm:$0xff]
    %v31 = vld [vmem:[%s0 + $0x80] sm:$0xff]
    %v32 = vld [vmem:[%s0 + $0x88] sm:$0x3]
    %v33 = vld [vmem:[%s0 + $0x90] sm:$0xff]
    %v34 = vld [vmem:[%s0 + $0x98] sm:$0xff]
    %v35 = vld [vmem:[%s0 + $0xa0] sm:$0x3]
    %v36 = vld [vmem:[%s0 + $0xa8] sm:$0xff]
    %v37 = vld [vmem:[%s0 + $0xb0] sm:$0xff]
    %v38 = vld [vmem:[%s0 + $0xb8] sm:$0x3]
    %v39 = vmax.f32 %v15, %v16
    %vm40 = vcmask 1041408
    %v41 = vsel %vm40, %v17, -inf
    %v42 = vmax.f32 %v39, %v41
    %v43 = vrot.slane %v42, 4
    %v44 = vmax.f32 %v42, %v43
    %v45 = vrot.slane %v44, 2
    %v46 = vmax.f32 %v44, %v45
    %v47 = vrot.slane %v46, 1
    %v48 = vmax.f32 %v46, %v47
    %v49 = vmax.f32 %v18, %v19
    %v50 = vsel %vm40, %v20, -inf
    %v51 = vmax.f32 %v49, %v50
    %v52 = vrot.slane %v51, 4
    %v53 = vmax.f32 %v51, %v52
    %v54 = vrot.slane %v53, 2
    %v55 = vmax.f32 %v53, %v54
    %v56 = vrot.slane %v55, 1
    %v57 = vmax.f32 %v55, %v56
    %v58 = vmax.f32 %v21, %v22
    %v59 = vsel %vm40, %v23, -inf
    %v60 = vmax.f32 %v58, %v59
    %v61 = vrot.slane %v60, 4
    %v62 = vmax.f32 %v60, %v61
    %v63 = vrot.slane %v62, 2
    %v64 = vmax.f32 %v62, %v63
    %v65 = vrot.slane %v64, 1
    %v66 = vmax.f32 %v64, %v65
    %v67 = vmax.f32 %v24, %v25
    %v68 = vsel %vm40, %v26, -inf
    %v69 = vmax.f32 %v67, %v68
    %v70 = vrot.slane %v69, 4
    %v71 = vmax.f32 %v69, %v70
    %v72 = vrot.slane %v71, 2
    %v73 = vmax.f32 %v71, %v72
    %v74 = vrot.slane %v73, 1
    %v75 = vmax.f32 %v73, %v74
    %v76 = vmax.f32 %v27, %v28
    %v77 = vsel %vm40, %v29, -inf
    %v78 = vmax.f32 %v76, %v77
    %v79 = vrot.slane %v78, 4
    %v80 = vmax.f32 %v78, %v79
    %v81 = vrot.slane %v80, 2
    %v82 = vmax.f32 %v80, %v81
    %v83 = vrot.slane %v82, 1
    %v84 = vmax.f32 %v82, %v83
    %v85 = vmax.f32 %v30, %v31
    %v86 = vsel %vm40, %v32, -inf
    %v87 = vmax.f32 %v85, %v86
    %v88 = vrot.slane %v87, 4
    %v89 = vmax.f32 %v87, %v88
    %v90 = vrot.slane %v89, 2
    %v91 = vmax.f32 %v89, %v90
    %v92 = vrot.slane %v91, 1
    %v93 = vmax.f32 %v91, %v92
    %v94 = vmax.f32 %v33, %v34
    %v95 = vsel %vm40, %v35, -inf
    %v96 = vmax.f32 %v94, %v95
    %v97 = vrot.slane %v96, 4
    %v98 = vmax.f32 %v96, %v97
    %v99 = vrot.slane %v98, 2
    %v100 = vmax.f32 %v98, %v99
    %v101 = vrot.slane %v100, 1
    %v102 = vmax.f32 %v100, %v101
    %v103 = vmax.f32 %v36, %v37
    %v104 = vsel %vm40, %v38, -inf
    %v105 = vmax.f32 %v103, %v104
    %v106 = vrot.slane %v105, 4
    %v107 = vmax.f32 %v105, %v106
    %v108 = vrot.slane %v107, 2
    %v109 = vmax.f32 %v107, %v108
    %v110 = vrot.slane %v109, 1
    %v111 = vmax.f32 %v109, %v110
    %vm120 = vcmask 1041409
    %v121 = vsel %vm120, %v57, %v48
    %vm122 = vcmask 1042434
    %v123 = vsel %vm122, %v66, %v121
    %vm124 = vcmask 1043459
    %v125 = vsel %vm124, %v75, %v123
    %vm126 = vcmask 1044484
    %v127 = vsel %vm126, %v84, %v125
    %vm128 = vcmask 1045509
    %v129 = vsel %vm128, %v93, %v127
    %vm130 = vcmask 1046534
    %v131 = vsel %vm130, %v102, %v129
    %vm132 = vcmask 1047559
    %v133 = vsel %vm132, %v111, %v131
    %135 = vrot.lane.b32.xlu0 %v133, 64
    %v136 = vpop.permute.xlu0 %135
    %v138 = vrot.slane %v136, 1
    %v139 = vrot.slane %v136, 2
    %v140 = vrot.slane %v136, 3
    %v141 = vrot.slane %v136, 4
    %v142 = vrot.slane %v136, 5
    %v143 = vrot.slane %v136, 6
    %v144 = vrot.slane %v136, 7
    %v153 = vmax.f32 %v48, %v136
    %v154 = vmax.f32 %v57, %v138
    %v155 = vmax.f32 %v66, %v139
    %v156 = vmax.f32 %v75, %v140
    %v157 = vmax.f32 %v84, %v141
    %v158 = vmax.f32 %v93, %v142
    %v159 = vmax.f32 %v102, %v143
    %v160 = vmax.f32 %v111, %v144
    %v169 = vrot.slane %v154, 7
    %v170 = vsel %vm120, %v169, %v153
    %v171 = vrot.slane %v155, 6
    %v172 = vsel %vm122, %v171, %v170
    %v173 = vrot.slane %v156, 5
    %v174 = vsel %vm124, %v173, %v172
    %v175 = vrot.slane %v157, 4
    %v176 = vsel %vm126, %v175, %v174
    %v177 = vrot.slane %v158, 3
    %v178 = vsel %vm128, %v177, %v176
    %v179 = vrot.slane %v159, 2
    %v180 = vsel %vm130, %v179, %v178
    %v181 = vrot.slane %v160, 1
    %v182 = vsel %vm132, %v181, %v180
    %184 = vrot.lane.b32.xlu0 %v182, 32
    %v185 = vpop.permute.xlu0 %184
    %v187 = vrot.slane %v185, 1
    %v188 = vrot.slane %v185, 2
    %v189 = vrot.slane %v185, 3
    %v190 = vrot.slane %v185, 4
    %v191 = vrot.slane %v185, 5
    %v192 = vrot.slane %v185, 6
    %v193 = vrot.slane %v185, 7
    %v202 = vmax.f32 %v153, %v185
    %v203 = vmax.f32 %v154, %v187
    %v204 = vmax.f32 %v155, %v188
    %v205 = vmax.f32 %v156, %v189
    %v206 = vmax.f32 %v157, %v190
    %v207 = vmax.f32 %v158, %v191
    %v208 = vmax.f32 %v159, %v192
    %v209 = vmax.f32 %v160, %v193
    %v210 = vld [vmem:[%s1] sm:$0xff]
    %v211 = vld [vmem:[%s1 + $0x8] sm:$0xff]
    %v212 = vld [vmem:[%s1 + $0x10] sm:$0xff]
    %v213 = vld [vmem:[%s1 + $0x18] sm:$0xff]
    %v214 = vld [vmem:[%s1 + $0x20] sm:$0xff]
    %v215 = vld [vmem:[%s1 + $0x28] sm:$0xff]
    %v216 = vld [vmem:[%s1 + $0x30] sm:$0xff]
    %v217 = vld [vmem:[%s1 + $0x38] sm:$0xff]
    %v218 = vld [vmem:[%s1 + $0x40] sm:$0xff]
    %v219 = vld [vmem:[%s1 + $0x48] sm:$0xff]
    %v220 = vld [vmem:[%s1 + $0x50] sm:$0xff]
    %v221 = vld [vmem:[%s1 + $0x58] sm:$0xff]
    %v222 = vld [vmem:[%s1 + $0x60] sm:$0xff]
    %v223 = vld [vmem:[%s1 + $0x68] sm:$0xff]
    %v224 = vld [vmem:[%s1 + $0x70] sm:$0xff]
    %v225 = vld [vmem:[%s1 + $0x78] sm:$0xff]
    %v226 = vld [vmem:[%s2] sm:$0x1]
    %v228 = vlaneseq
    %v229 = vshrl.u32 %v228, 7
    %v230 = vsub.s32 0, %v229
    %v231 = vrot.slane %v226, %v230
    %v241 = vrot.slane %v203, 7
    %v242 = vsel %vm120, %v241, %v202
    %v243 = vrot.slane %v204, 6
    %v244 = vsel %vm122, %v243, %v242
    %v245 = vrot.slane %v205, 5
    %v246 = vsel %vm124, %v245, %v244
    %v247 = vrot.slane %v206, 4
    %v248 = vsel %vm126, %v247, %v246
    %v249 = vrot.slane %v207, 3
    %v250 = vsel %vm128, %v249, %v248
    %v251 = vrot.slane %v208, 2
    %v252 = vsel %vm130, %v251, %v250
    %v253 = vrot.slane %v209, 1
    %v254 = vsel %vm132, %v253, %v252
    %256 = vmatprep.subr.mxu0 0.0
    %257 = vmatpush1.msra.mxu0 %v210
    %258 = vmatprep.subr.mxu0 0.0
    %259 = vmatpush1.msra.mxu0 %v211
    %260 = vmatprep.subr.mxu0 0.0
    %261 = vmatpush1.msra.mxu0 %v212
    %262 = vmatprep.subr.mxu0 0.0
    %263 = vmatpush1.msra.mxu0 %v213
    %264 = vmatprep.subr.mxu0 0.0
    %265 = vmatpush1.msra.mxu0 %v214
    %266 = vmatprep.subr.mxu0 0.0
    %267 = vmatpush1.msra.mxu0 %v215
    %268 = vmatprep.subr.mxu0 0.0
    %269 = vmatpush1.msra.mxu0 %v216
    %270 = vmatprep.subr.mxu0 0.0
    %271 = vmatpush1.msra.mxu0 %v217
    %272 = vmatprep.subr.mxu0 0.0
    %273 = vmatpush1.msra.mxu0 %v218
    %274 = vmatprep.subr.mxu0 0.0
    %275 = vmatpush1.msra.mxu0 %v219
    %276 = vmatprep.subr.mxu0 0.0
    %277 = vmatpush1.msra.mxu0 %v220
    %278 = vmatprep.subr.mxu0 0.0
    %279 = vmatpush1.msra.mxu0 %v221
    %280 = vmatprep.subr.mxu0 0.0
    %281 = vmatpush1.msra.mxu0 %v222
    %282 = vmatprep.subr.mxu0 0.0
    %283 = vmatpush1.msra.mxu0 %v223
    %284 = vmatprep.subr.mxu0 0.0
    %285 = vmatpush1.msra.mxu0 %v224
    %286 = vmatprep.subr.mxu0 0.0
    %287 = vmatpush1.msra.mxu0 %v225
    %288 = vmatprep.subr.mxu0 0.0
    %289 = vmatpush1.msra.mxu0 0.0
    %290 = vmatprep.subr.mxu0 0.0
    %291 = vmatpush1.msra.mxu0 0.0
    %292 = vmatprep.subr.mxu0 0.0
    %293 = vmatpush1.msra.mxu0 0.0
    %294 = vmatprep.subr.mxu0 0.0
    %295 = vmatpush1.msra.mxu0 0.0
    %296 = vmatprep.subr.mxu0 0.0
    %297 = vmatpush1.msra.mxu0 0.0
    %298 = vmatprep.subr.mxu0 0.0
    %299 = vmatpush1.msra.mxu0 0.0
    %300 = vmatprep.subr.mxu0 0.0
    %301 = vmatpush1.msra.mxu0 0.0
    %302 = vmatprep.subr.mxu0 0.0
    %303 = vmatpush1.msra.mxu0 0.0
    %304 = vmatprep.subr.mxu0 0.0
    %305 = vmatpush1.msra.mxu0 0.0
    %306 = vmatprep.subr.mxu0 0.0
    %307 = vmatpush1.msra.mxu0 0.0
    %308 = vmatprep.subr.mxu0 0.0
    %309 = vmatpush1.msra.mxu0 0.0
    %310 = vmatprep.subr.mxu0 0.0
    %311 = vmatpush1.msra.mxu0 0.0
    %312 = vmatprep.subr.mxu0 0.0
    %313 = vmatpush1.msra.mxu0 0.0
    %314 = vmatprep.subr.mxu0 0.0
    %315 = vmatpush1.msra.mxu0 0.0
    %316 = vmatprep.subr.mxu0 0.0
    %317 = vmatpush1.msra.mxu0 0.0
    %318 = vmatprep.subr.mxu0 0.0
    %319 = vmatpush1.msra.mxu0 0.0
    %320 = vmatprep.mubr.f32.mxu0 0.0
    %321 = vmatmul.mubr.f32.gmra.mrb[0].mxu0 %v254
    %v322 = vpop.f32.mrb[0].mxu0
    %v323 = vadd.f32 %v231, %v322
    %v324 = vpop.f32.mrb[0].mxu0
    %325 = vdwg.mxu0
    %326 = vst [vmem:[#allocation2] sm:$0xff] %v323
    // Predicated region
    $region14: #{tpu_custom_call.1} parent=1 // pred_check
      _
    $region15: #{tpu_custom_call.1} parent=1 // pred_check_branch
      %328 = sbr.rel (0) target = $region17
    $region16: #{tpu_custom_call.1} parent=1 // pred_region
      %s330 = ssub.s32 128, 128
      %331 = vsyncadd [#allocation3], %s330
      %s333 = sshll.u32 [#allocation2], 4
      %s334 = int_to_ptr.vmem [resolvable:$true] %s333
      %336 = dma.vmem_to_hbm [thread:$0]  %s334, 128, %s3, [#allocation3]
    $region17: #{tpu_custom_call.1} parent=1 // pred_fallthru
      _
    // Predicated region
    $region18: #{tpu_custom_call.1} parent=1 // pred_check
      _
    $region19: #{tpu_custom_call.1} parent=1 // pred_check_branch
      %338 = sbr.rel (0) target = $region21
    $region20: #{tpu_custom_call.1} parent=1 // pred_region
      %339 = dma.done [#allocation3], 128
    $region21: #{tpu_custom_call.1} parent=1 // pred_fallthru
      _
    %340 = vsyncpa [#allocation3], 1

</llo_original>
